<compile_context>
chip_gen: v6e
topology: v6e:2x2x1
jax: 0.10.0
libtpu: 0.0.40
codegen_flags: <defaults>
</compile_context>

<pallas_src>
import functools

import jax
import jax.numpy as jnp
from jax.experimental import pallas as pl
from jax.experimental.pallas import tpu as pltpu

_NEG_LARGE = -1e30  # drives padded logits to exp() == 0 without inf arithmetic


def _round_up(n, m):
    return ((n + m - 1) // m) * m


def pasnet_kernel(x_ref, w1_ref, b1_ref, w2_ref, b2_ref, w3_ref, b3_ref, o_ref):
    # Layer 1: Linear (bf16 operands, f32 accumulate) -> sigmoid (f32)
    h1 = jnp.dot(x_ref[...], w1_ref[...], preferred_element_type=jnp.float32)
    h1 = jax.nn.sigmoid(h1 + b1_ref[...])

    # Layer 2: Linear -> sigmoid
    h2 = jnp.dot(h1.astype(jnp.bfloat16), w2_ref[...],
                 preferred_element_type=jnp.float32)
    h2 = jax.nn.sigmoid(h2 + b2_ref[...])

    # Layer 3: Linear -> softmax over the (padded, lane-dense) feature axis.
    logits = jnp.dot(h2.astype(jnp.bfloat16), w3_ref[...],
                     preferred_element_type=jnp.float32)
    logits = logits + b3_ref[...]          # padded lanes get ~-1e30 -> exp()=0
    m = jnp.max(logits, axis=1, keepdims=True)
    e = jnp.exp(logits - m)
    denom = jnp.sum(e, axis=1, keepdims=True)
    o_ref[...] = (e / denom).astype(o_ref.dtype)   # bf16 lane-dense store


def prepare_pasnet_params(w1t, b1, w2t, b2, w3t, b3):
    """One-time parameter preparation: pad feature dims to multiples of 128,
    cast weights to bf16 (MXU operands) and biases to f32 (VPU math).
    wKt: (in_k, out_k) transposed Linear weights; bK: (1, out_k)."""
    In, P = w1t.shape
    _, H = w2t.shape
    _, Out = w3t.shape

    P_p = _round_up(P, 128)
    H_p = _round_up(H, 128)
    Out_p = _round_up(Out, 128)

    f32, bf16 = jnp.float32, jnp.bfloat16
    w1p = jnp.zeros((In, P_p), bf16).at[:, :P].set(w1t.astype(bf16))
    b1p = jnp.zeros((1, P_p), f32).at[:, :P].set(b1.astype(f32))
    w2p = jnp.zeros((P_p, H_p), bf16).at[:P, :H].set(w2t.astype(bf16))
    b2p = jnp.zeros((1, H_p), f32).at[:, :H].set(b2.astype(f32))
    w3p = jnp.zeros((H_p, Out_p), bf16).at[:H, :Out].set(w3t.astype(bf16))
    # Padded output columns get a huge negative bias so softmax ignores them.
    b3p = jnp.full((1, Out_p), _NEG_LARGE, f32).at[:, :Out].set(b3.astype(f32))

    meta = dict(In=In, P=P, H=H, Out=Out, P_p=P_p, H_p=H_p, Out_p=Out_p)
    return (w1p, b1p, w2p, b2p, w3p, b3p), meta


def _choose_batch_tile(B, block_b):
    """Batch tile: multiple of 8 sublanes, capped at block_b, and sized so the
    grid has >= 2 steps whenever the batch is large enough (v7x: both TCs)."""
    B8 = _round_up(B, 8)
    if B8 <= 16:
        return B8                      # tiny batch: a single step is fine
    half = _round_up((B8 + 1) // 2, 8)  # aim for ~2 fat grid steps
    return min(block_b, half)


@functools.partial(jax.jit, static_argnames=("out_features", "block_b"))
def pasnet_forward(x, params, *, out_features, block_b=1024):
    """x: (B, In) float32. params: output of prepare_pasnet_params()."""
    w1p, b1p, w2p, b2p, w3p, b3p = params
    B, In = x.shape
    In_w, P_p = w1p.shape
    H_p = w2p.shape[1]
    Out_p = w3p.shape[1]
    assert In == In_w, "x feature dim must match prepared W1"

    # Batch tiling only (feature dims already prepared); no x lane-padding.
    TB = _choose_batch_tile(B, block_b)
    B_p = _round_up(B, TB)
    grid = (B_p // TB,)

    bf16 = jnp.bfloat16
    if B_p == B:
        xp = x.astype(bf16)
    else:
        xp = jnp.zeros((B_p, In), bf16).at[:B, :].set(x.astype(bf16))

    flops = 2 * B_p * (In * P_p + P_p * H_p + H_p * Out_p)
    transcendentals = B_p * (P_p + H_p + Out_p)
    bytes_accessed = (xp.size * 2
                      + w1p.size * 2 + w2p.size * 2 + w3p.size * 2
                      + b1p.size * 4 + b2p.size * 4 + b3p.size * 4
                      + B_p * Out_p * 2)          # bf16 output writeback

    out = pl.pallas_call(
        pasnet_kernel,
        out_shape=jax.ShapeDtypeStruct((B_p, Out_p), jnp.bfloat16),
        grid=grid,
        in_specs=[
            pl.BlockSpec((TB, In), lambda i: (i, 0)),       # x tile (narrow K)
            pl.BlockSpec((In, P_p), lambda i: (0, 0)),      # W1 (resident)
            pl.BlockSpec((1, P_p), lambda i: (0, 0)),       # b1 (resident)
            pl.BlockSpec((P_p, H_p), lambda i: (0, 0)),     # W2 (resident)
            pl.BlockSpec((1, H_p), lambda i: (0, 0)),       # b2 (resident)
            pl.BlockSpec((H_p, Out_p), lambda i: (0, 0)),   # W3 (resident)
            pl.BlockSpec((1, Out_p), lambda i: (0, 0)),     # b3 (resident)
        ],
        out_specs=pl.BlockSpec((TB, Out_p), lambda i: (i, 0)),
        compiler_params=pltpu.CompilerParams(
            dimension_semantics=("parallel",)),
        cost_estimate=pl.CostEstimate(
            flops=flops,
            transcendentals=transcendentals,
            bytes_accessed=bytes_accessed),
    )(xp, w1p, b1p, w2p, b2p, w3p, b3p)

    # Slice + cast happen inside the same jit, so XLA fuses them with any
    # downstream consumer instead of materializing an extra padded pass.
    return out[:B, :out_features].astype(jnp.float32)


def init_linear_params(key, in_features, out_features):
    """Deterministic init mimicking nn.Linear's uniform(-1/sqrt(in), 1/sqrt(in)).
    Returns (W_transposed: (in, out), bias: (1, out))."""
    kw, kb = jax.random.split(key)
    bound = 1.0 / jnp.sqrt(jnp.float32(in_features))
    w = jax.random.uniform(kw, (out_features, in_features), jnp.float32,
                           minval=-bound, maxval=bound)
    b = jax.random.uniform(kb, (out_features,), jnp.float32,
                           minval=-bound, maxval=bound)
    return w.T, b.reshape(1, out_features)


def pasnet_reference(x, w1t, b1, w2t, b2, w3t, b3):
    h1 = jax.nn.sigmoid(x @ w1t + b1)
    h2 = jax.nn.sigmoid(h1 @ w2t + b2)
    return jax.nn.softmax(h2 @ w3t + b3, axis=1)


if __name__ == "__main__":
    # Module-consistent shapes (PASNet defaults: Pathway=200, Hidden=64).
    In_Nodes, Pathway_Nodes, Hidden_Nodes, Out_Nodes = 32, 200, 64, 4

    key = jax.random.PRNGKey(0)
    kx, k1, k2, k3, kx2 = jax.random.split(key, 5)

    w1t, b1 = init_linear_params(k1, In_Nodes, Pathway_Nodes)
    w2t, b2 = init_linear_params(k2, Pathway_Nodes, Hidden_Nodes)
    w3t, b3 = init_linear_params(k3, Hidden_Nodes, Out_Nodes)

    # One-time parameter prep (padding + bf16 cast hoisted out of the forward).
    params, _ = prepare_pasnet_params(w1t, b1, w2t, b2, w3t, b3)
    params = jax.tree_util.tree_map(jax.block_until_ready, params)

    # Small batch (single grid step).
    batch = 8
    x = jax.random.normal(kx, (batch, In_Nodes), jnp.float32)
    out = jax.block_until_ready(
        pasnet_forward(x, params, out_features=Out_Nodes))
    ref = pasnet_reference(x, w1t, b1, w2t, b2, w3t, b3)
    assert out.shape == (batch, Out_Nodes)
    # bf16 MXU operands + bf16 output => loosened tolerance vs pure-f32 ref.
    assert jnp.allclose(out, ref, atol=2e-2), "mismatch vs. pure-JAX reference (small batch)"
    assert jnp.allclose(jnp.sum(out, axis=1), 1.0, atol=1e-2), "softmax rows must sum to ~1"

    # Larger batch exercising a 2-step grid with a partial final tile
    # (304 padded rows -> TB=152, grid=(2,), both v7x TCs engaged).
    batch2 = 300
    x2 = jax.random.normal(kx2, (batch2, In_Nodes), jnp.float32)
    out2 = jax.block_until_ready(
        pasnet_forward(x2, params, out_features=Out_Nodes))
    ref2 = pasnet_reference(x2, w1t, b1, w2t, b2, w3t, b3)
    assert out2.shape == (batch2, Out_Nodes)
    assert jnp.allclose(out2, ref2, atol=2e-2), "mismatch vs. pure-JAX reference (large batch)"
    assert jnp.allclose(jnp.sum(out2, axis=1), 1.0, atol=1e-2), "softmax rows must sum to ~1"

    print("KERNEL_OK")
</pallas_src>

<mosaic_0001>
module attributes {stable_mosaic.version = 11 : i64} {
  func.func @pasnet_kernel(%arg0: i32, %arg1: memref<8x32xbf16, #tpu.memory_space<vmem>>, %arg2: memref<32x256xbf16, #tpu.memory_space<vmem>>, %arg3: memref<1x256xf32, #tpu.memory_space<vmem>>, %arg4: memref<256x128xbf16, #tpu.memory_space<vmem>>, %arg5: memref<1x128xf32, #tpu.memory_space<vmem>>, %arg6: memref<128x128xbf16, #tpu.memory_space<vmem>>, %arg7: memref<1x128xf32, #tpu.memory_space<vmem>>, %arg8: memref<8x128xbf16, #tpu.memory_space<vmem>>) attributes {dimension_semantics = [#tpu.dimension_semantics<parallel>], iteration_bounds = array<i64: 1>, scalar_prefetch = 0 : i64, scratch_operands = 0 : i64, tpu.core_type = #tpu.core_type<tc>, window_params = [{transform_indices = @transform_0, window_bounds = array<i64: 8, 32>}, {pipeline_mode = #tpu.pipeline_mode<synchronous>, transform_indices = @transform_1, window_bounds = array<i64: 32, 256>}, {pipeline_mode = #tpu.pipeline_mode<synchronous>, transform_indices = @transform_2, window_bounds = array<i64: 1, 256>}, {pipeline_mode = #tpu.pipeline_mode<synchronous>, transform_indices = @transform_3, window_bounds = array<i64: 256, 128>}, {pipeline_mode = #tpu.pipeline_mode<synchronous>, transform_indices = @transform_4, window_bounds = array<i64: 1, 128>}, {pipeline_mode = #tpu.pipeline_mode<synchronous>, transform_indices = @transform_5, window_bounds = array<i64: 128, 128>}, {pipeline_mode = #tpu.pipeline_mode<synchronous>, transform_indices = @transform_6, window_bounds = array<i64: 1, 128>}, {transform_indices = @transform_7, window_bounds = array<i64: 8, 128>}]} {
    %c0 = arith.constant 0 : index
    %c0_0 = arith.constant 0 : index
    %0 = vector.load %arg1[%c0, %c0_0] : memref<8x32xbf16, #tpu.memory_space<vmem>>, vector<8x32xbf16>
    %c0_1 = arith.constant 0 : index
    %c0_2 = arith.constant 0 : index
    %1 = vector.load %arg2[%c0_1, %c0_2] : memref<32x256xbf16, #tpu.memory_space<vmem>>, vector<32x256xbf16>
    %cst = arith.constant dense<0.000000e+00> : vector<8x256xf32>
    %2 = tpu.matmul %0, %1, %cst {dimension_numbers = #tpu.dot_dimension_numbers<[1], [0], [0], [1], [0, 0, 1, 1], [], []>} : vector<8x32xbf16>, vector<32x256xbf16>, vector<8x256xf32> -> vector<8x256xf32>
    %c0_3 = arith.constant 0 : index
    %c0_4 = arith.constant 0 : index
    %3 = vector.load %arg3[%c0_3, %c0_4] : memref<1x256xf32, #tpu.memory_space<vmem>>, vector<1x256xf32>
    %4 = vector.broadcast %3 : vector<1x256xf32> to vector<8x256xf32>
    %5 = arith.addf %2, %4 : vector<8x256xf32>
    %6 = arith.negf %5 : vector<8x256xf32>
    %7 = math.exp %6 : vector<8x256xf32>
    %cst_5 = arith.constant 1.000000e+00 : f32
    %8 = vector.broadcast %cst_5 : f32 to vector<8x256xf32>
    %9 = arith.addf %8, %7 : vector<8x256xf32>
    %10 = arith.divf %8, %9 : vector<8x256xf32>
    %11 = arith.truncf %10 : vector<8x256xf32> to vector<8x256xbf16>
    %c0_6 = arith.constant 0 : index
    %c0_7 = arith.constant 0 : index
    %12 = vector.load %arg4[%c0_6, %c0_7] : memref<256x128xbf16, #tpu.memory_space<vmem>>, vector<256x128xbf16>
    %cst_8 = arith.constant dense<0.000000e+00> : vector<8x128xf32>
    %13 = tpu.matmul %11, %12, %cst_8 {dimension_numbers = #tpu.dot_dimension_numbers<[1], [0], [0], [1], [0, 0, 1, 1], [], []>} : vector<8x256xbf16>, vector<256x128xbf16>, vector<8x128xf32> -> vector<8x128xf32>
    %c0_9 = arith.constant 0 : index
    %c0_10 = arith.constant 0 : index
    %14 = vector.load %arg5[%c0_9, %c0_10] : memref<1x128xf32, #tpu.memory_space<vmem>>, vector<1x128xf32>
    %15 = vector.broadcast %14 : vector<1x128xf32> to vector<8x128xf32>
    %16 = arith.addf %13, %15 : vector<8x128xf32>
    %17 = arith.negf %16 : vector<8x128xf32>
    %18 = math.exp %17 : vector<8x128xf32>
    %cst_11 = arith.constant 1.000000e+00 : f32
    %19 = vector.broadcast %cst_11 : f32 to vector<8x128xf32>
    %20 = arith.addf %19, %18 : vector<8x128xf32>
    %21 = arith.divf %19, %20 : vector<8x128xf32>
    %22 = arith.truncf %21 : vector<8x128xf32> to vector<8x128xbf16>
    %c0_12 = arith.constant 0 : index
    %c0_13 = arith.constant 0 : index
    %23 = vector.load %arg6[%c0_12, %c0_13] : memref<128x128xbf16, #tpu.memory_space<vmem>>, vector<128x128xbf16>
    %cst_14 = arith.constant dense<0.000000e+00> : vector<8x128xf32>
    %24 = tpu.matmul %22, %23, %cst_14 {dimension_numbers = #tpu.dot_dimension_numbers<[1], [0], [0], [1], [0, 0, 1, 1], [], []>} : vector<8x128xbf16>, vector<128x128xbf16>, vector<8x128xf32> -> vector<8x128xf32>
    %c0_15 = arith.constant 0 : index
    %c0_16 = arith.constant 0 : index
    %25 = vector.load %arg7[%c0_15, %c0_16] : memref<1x128xf32, #tpu.memory_space<vmem>>, vector<1x128xf32>
    %26 = vector.broadcast %25 : vector<1x128xf32> to vector<8x128xf32>
    %27 = arith.addf %24, %26 : vector<8x128xf32>
    %cst_17 = arith.constant dense<0xFF800000> : vector<8xf32>
    %28 = vector.multi_reduction <maximumf>, %27, %cst_17 [1] : vector<8x128xf32> to vector<8xf32>
    %29 = vector.shape_cast %28 : vector<8xf32> to vector<8x1xf32>
    %30 = vector.broadcast %29 : vector<8x1xf32> to vector<8x128xf32>
    %31 = arith.subf %27, %30 : vector<8x128xf32>
    %32 = math.exp %31 : vector<8x128xf32>
    %cst_18 = arith.constant dense<0.000000e+00> : vector<8xf32>
    %33 = vector.multi_reduction <add>, %32, %cst_18 [1] : vector<8x128xf32> to vector<8xf32>
    %34 = vector.shape_cast %33 : vector<8xf32> to vector<8x1xf32>
    %35 = vector.broadcast %34 : vector<8x1xf32> to vector<8x128xf32>
    %36 = arith.divf %32, %35 : vector<8x128xf32>
    %37 = arith.truncf %36 : vector<8x128xf32> to vector<8x128xbf16>
    %c0_19 = arith.constant 0 : index
    %c0_20 = arith.constant 0 : index
    %38 = vector.load %arg8[%c0_19, %c0_20] : memref<8x128xbf16, #tpu.memory_space<vmem>>, vector<8x128xbf16>
    tpu.vector_store %arg8[%c0_19, %c0_20], %37 {strides = array<i32>} : memref<8x128xbf16, #tpu.memory_space<vmem>>, vector<8x128xbf16>,
    return
  }
  func.func @transform_0(%arg0: i32) -> (i32, i32) {
    %c0_i32 = arith.constant 0 : i32
    %c0_i32_0 = arith.constant 0 : i32
    return %arg0, %c0_i32 : i32, i32
  }
  func.func @transform_1(%arg0: i32) -> (i32, i32) {
    %c0_i32 = arith.constant 0 : i32
    %c0_i32_0 = arith.constant 0 : i32
    %c0_i32_1 = arith.constant 0 : i32
    return %c0_i32, %c0_i32_0 : i32, i32
  }
  func.func @transform_2(%arg0: i32) -> (i32, i32) {
    %c0_i32 = arith.constant 0 : i32
    %c0_i32_0 = arith.constant 0 : i32
    %c0_i32_1 = arith.constant 0 : i32
    return %c0_i32, %c0_i32_0 : i32, i32
  }
  func.func @transform_3(%arg0: i32) -> (i32, i32) {
    %c0_i32 = arith.constant 0 : i32
    %c0_i32_0 = arith.constant 0 : i32
    %c0_i32_1 = arith.constant 0 : i32
    return %c0_i32, %c0_i32_0 : i32, i32
  }
  func.func @transform_4(%arg0: i32) -> (i32, i32) {
    %c0_i32 = arith.constant 0 : i32
    %c0_i32_0 = arith.constant 0 : i32
    %c0_i32_1 = arith.constant 0 : i32
    return %c0_i32, %c0_i32_0 : i32, i32
  }
  func.func @transform_5(%arg0: i32) -> (i32, i32) {
    %c0_i32 = arith.constant 0 : i32
    %c0_i32_0 = arith.constant 0 : i32
    %c0_i32_1 = arith.constant 0 : i32
    return %c0_i32, %c0_i32_0 : i32, i32
  }
  func.func @transform_6(%arg0: i32) -> (i32, i32) {
    %c0_i32 = arith.constant 0 : i32
    %c0_i32_0 = arith.constant 0 : i32
    %c0_i32_1 = arith.constant 0 : i32
    return %c0_i32, %c0_i32_0 : i32, i32
  }
  func.func @transform_7(%arg0: i32) -> (i32, i32) {
    %c0_i32 = arith.constant 0 : i32
    %c0_i32_0 = arith.constant 0 : i32
    return %arg0, %c0_i32 : i32, i32
  }
}

</mosaic_0001>

<llo_original>
// kernel: pasnet_forward.1
$region0: #{pasnet_forward.1}
  #allocation0 [shape = 'u32[]', space=smem, size = 0x4, offset = 0x4, fixed_abs, tag = 'smem constant byte address 0x4 - core index']
  #allocation1 [shape = 'u32[144,128]{1,0:T(1,128)}', space=vmem, size = 0x12000, scoped, tag = 'internal scratch']
  %s0 = inlined_call_operand.vmem [shape: bf16[8,32], index: 0, kind: input, shape index: {}]
  %s1 = inlined_call_operand.hbm [shape: bf16[32,256], index: 1, kind: input, shape index: {}]
  %s2 = inlined_call_operand.vmem [shape: f32[1,256], index: 2, kind: input, shape index: {}]
  %s3 = inlined_call_operand.hbm [shape: bf16[256,128], index: 3, kind: input, shape index: {}]
  %s4 = inlined_call_operand.vmem [shape: f32[1,128], index: 4, kind: input, shape index: {}]
  %s5 = inlined_call_operand.hbm [shape: bf16[128,128], index: 5, kind: input, shape index: {}]
  %s6 = inlined_call_operand.vmem [shape: f32[1,128], index: 6, kind: input, shape index: {}]
  %s7 = inlined_call_operand.vmem [shape: bf16[8,128], index: 7, kind: output, shape index: {}]
  %s8 = sld [smem:[#allocation0]]
  $region50: #{pasnet_forward.1} parent=0
    _
  %s10 = ssub.s32 1, %s8
  %s11 = scalar_select 0, %s10, %s8
  $region1: #{pasnet_forward.1} parent=0
    #allocation2 [shape = 'u8[16384]{0}', space=vmem, size = 0x4000, scoped, tag = 'input window, operand 1, single buffered']
    #allocation3 [shape = 's32[1]{0}', space=sflag, size = 0x4, scoped, tag = 'scoped memory for pasnet_forward.1']
    #allocation4 [shape = 'u8[65536]{0}', space=vmem, size = 0x10000, scoped, tag = 'input window, operand 3, single buffered']
    #allocation5 [shape = 's32[1]{0}', space=sflag, size = 0x4, scoped, tag = 'scoped memory for pasnet_forward.1']
    #allocation6 [shape = 'u8[32768]{0}', space=vmem, size = 0x8000, scoped, tag = 'input window, operand 5, single buffered']
    %12 = vsyncpa [#allocation3], 0
    %13 = vsyncpa [#allocation5], 0
    // Predicated region
    $region2: #{pasnet_forward.1} parent=1 // pred_check
      _
    $region3: #{pasnet_forward.1} parent=1 // pred_check_branch
      %15 = sbr.rel (0) target = $region5
    $region4: #{pasnet_forward.1} parent=1 // pred_region
      _
    $region5: #{pasnet_forward.1} parent=1 // pred_fallthru
      _
    // Predicated region
    $region6: #{pasnet_forward.1} parent=1 // pred_check
      _
    $region7: #{pasnet_forward.1} parent=1 // pred_check_branch
      %17 = sbr.rel (0) target = $region9
    $region8: #{pasnet_forward.1} parent=1 // pred_region
      %s19 = ssub.s32 512, 512
      %20 = vsyncadd [#allocation3], %s19
      %s21 = sshll.u32 [#allocation2], 4
      %s22 = int_to_ptr.vmem [resolvable:$true] %s21
      %27 = dma.hbm_to_vmem [thread:$0]  %s1, 512, %s22, [#allocation3], 128, 128, 8
    $region9: #{pasnet_forward.1} parent=1 // pred_fallthru
      _
    // Predicated region
    $region10: #{pasnet_forward.1} parent=1 // pred_check
      _
    $region11: #{pasnet_forward.1} parent=1 // pred_check_branch
      %29 = sbr.rel (0) target = $region13
    $region12: #{pasnet_forward.1} parent=1 // pred_region
      _
    $region13: #{pasnet_forward.1} parent=1 // pred_fallthru
      _
    // Predicated region
    $region14: #{pasnet_forward.1} parent=1 // pred_check
      _
    $region15: #{pasnet_forward.1} parent=1 // pred_check_branch
      %31 = sbr.rel (0) target = $region17
    $region16: #{pasnet_forward.1} parent=1 // pred_region
      %s33 = ssub.s32 2048, 2048
      %34 = vsyncadd [#allocation5], %s33
      %s35 = sshll.u32 [#allocation4], 4
      %s36 = int_to_ptr.vmem [resolvable:$true] %s35
      %41 = dma.hbm_to_vmem [thread:$0]  %s3, 2048, %s36, [#allocation5], 64, 64, 4
    $region17: #{pasnet_forward.1} parent=1 // pred_fallthru
      _
    // Predicated region
    $region18: #{pasnet_forward.1} parent=1 // pred_check
      _
    $region19: #{pasnet_forward.1} parent=1 // pred_check_branch
      %43 = sbr.rel (0) target = $region21
    $region20: #{pasnet_forward.1} parent=1 // pred_region
      _
    $region21: #{pasnet_forward.1} parent=1 // pred_fallthru
      _
    // Predicated region
    $region22: #{pasnet_forward.1} parent=1 // pred_check
      _
    $region23: #{pasnet_forward.1} parent=1 // pred_check_branch
      %45 = sbr.rel (0) target = $region25
    $region24: #{pasnet_forward.1} parent=1 // pred_region
      %s47 = ssub.s32 1024, 1024
      %48 = vsyncadd [#allocation5], %s47
      %s49 = sshll.u32 [#allocation6], 4
      %s50 = int_to_ptr.vmem [resolvable:$true] %s49
      %55 = dma.hbm_to_vmem [thread:$0]  %s5, 1024, %s50, [#allocation5], 64, 64, 4
    $region25: #{pasnet_forward.1} parent=1 // pred_fallthru
      _
    // Predicated region
    $region26: #{pasnet_forward.1} parent=1 // pred_check
      _
    $region27: #{pasnet_forward.1} parent=1 // pred_check_branch
      %57 = sbr.rel (0) target = $region29
    $region28: #{pasnet_forward.1} parent=1 // pred_region
      _
    $region29: #{pasnet_forward.1} parent=1 // pred_fallthru
      _
    // Predicated region
    $region30: #{pasnet_forward.1} parent=1 // pred_check
      _
    $region31: #{pasnet_forward.1} parent=1 // pred_check_branch
      %59 = sbr.rel (0) target = $region33
    $region32: #{pasnet_forward.1} parent=1 // pred_region
      %60 = dma.done [#allocation3], 512
    $region33: #{pasnet_forward.1} parent=1 // pred_fallthru
      _
    // Predicated region
    $region34: #{pasnet_forward.1} parent=1 // pred_check
      _
    $region35: #{pasnet_forward.1} parent=1 // pred_check_branch
      %62 = sbr.rel (0) target = $region37
    $region36: #{pasnet_forward.1} parent=1 // pred_region
      %63 = dma.done [#allocation5], 2048
    $region37: #{pasnet_forward.1} parent=1 // pred_fallthru
      _
    // Predicated region
    $region38: #{pasnet_forward.1} parent=1 // pred_check
      _
    $region39: #{pasnet_forward.1} parent=1 // pred_check_branch
      %65 = sbr.rel (0) target = $region41
    $region40: #{pasnet_forward.1} parent=1 // pred_region
      %66 = dma.done [#allocation5], 1024
    $region41: #{pasnet_forward.1} parent=1 // pred_fallthru
      _
    %v68 = vld [vmem:[%s0] sm:$0xf]
    %v69 = vld [vmem:[#allocation2] sm:$0xff]
    %v70 = vld [vmem:[#allocation2 + $0x8] sm:$0xff]
    %v71 = vld [vmem:[#allocation2 + $0x10] sm:$0xff]
    %v72 = vld [vmem:[#allocation2 + $0x18] sm:$0xff]
    %v73 = vld [vmem:[%s2] sm:$0x3]
    %v75 = vlaneseq
    %v76 = vshrl.u32 %v75, 7
    %v77 = vsub.s32 0, %v76
    %v78 = vrot.slane %v73, %v77
    %v79 = vlaneseq
    %v80 = vshrl.u32 %v79, 7
    %v81 = vsub.s32 1, %v80
    %v82 = vrot.slane %v73, %v81
    %v89 = vunpack.c.l.b16 %v69
    %v90 = vunpack.c.h.b16 %v69
    %v91 = vunpack.c.l.b16 %v70
    %v92 = vunpack.c.h.b16 %v70
    %v93 = vunpack.c.l.b16 %v71
    %v94 = vunpack.c.h.b16 %v71
    %v95 = vunpack.c.l.b16 %v72
    %v96 = vunpack.c.h.b16 %v72
    %v97 = vpack.c.b16 %v91, %v89
    %v98 = vpack.c.b16 %v92, %v90
    %v99 = vpack.c.b16 %v95, %v93
    %v100 = vpack.c.b16 %v96, %v94
    %vm105 = vcmask 261120
    %v107 = vsel %vm105, %v68, 0
    %109 = vmatprep.subr.bf16.mxu0 0
    %110 = vmatpush1.bf16.msra.mxu0 0
    %111 = vmatprep.subr.bf16.mxu0 0
    %112 = vmatpush1.bf16.msra.mxu0 0
    %113 = vmatprep.subr.bf16.mxu0 0
    %114 = vmatpush1.bf16.msra.mxu0 0
    %115 = vmatprep.subr.bf16.mxu0 0
    %116 = vmatpush1.bf16.msra.mxu0 0
    %117 = vmatprep.subr.bf16.mxu0 0
    %118 = vmatpush1.bf16.msra.mxu0 0
    %119 = vmatprep.subr.bf16.mxu0 0
    %120 = vmatpush1.bf16.msra.mxu0 0
    %121 = vmatprep.subr.bf16.mxu0 %v100
    %122 = vmatpush1.bf16.msra.mxu0 %v99
    %123 = vmatprep.subr.bf16.mxu0 %v98
    %124 = vmatpush1.bf16.msra.mxu0 %v97
    %125 = vmatprep.subr.bf16.mxu0 0
    %126 = vmatpush2.bf16.msra.mxu0 0
    %127 = vmatprep.subr.bf16.mxu0 0
    %128 = vmatpush2.bf16.msra.mxu0 0
    %129 = vmatprep.subr.bf16.mxu0 0
    %130 = vmatpush2.bf16.msra.mxu0 0
    %131 = vmatprep.subr.bf16.mxu0 0
    %132 = vmatpush2.bf16.msra.mxu0 0
    %133 = vmatprep.subr.bf16.mxu0 0
    %134 = vmatpush2.bf16.msra.mxu0 0
    %135 = vmatprep.subr.bf16.mxu0 0
    %136 = vmatpush2.bf16.msra.mxu0 0
    %137 = vmatprep.subr.bf16.mxu0 0
    %138 = vmatpush2.bf16.msra.mxu0 0
    %139 = vmatprep.subr.bf16.mxu0 0
    %140 = vmatpush2.bf16.msra.mxu0 0
    %141 = vmatprep.mubr.bf16.mxu0 0
    %142 = vmatmul.mubr.bf16.gmra.mxu0 %v107
    %v143 = vpop.f32.mrf.mxu0
    %v144 = vadd.f32 %v78, %v143
    %v145 = vpop.f32.mrf.mxu0
    %v146 = vadd.f32 %v82, %v145
    %v147 = vpop.f32.mrf.mxu0
    %v148 = vpop.f32.mrf.mxu0
    %149 = vdwg.mxu0
    %v150 = vxor.u32 %v144, 2147483648
    %v151 = vxor.u32 %v146, 2147483648
    %v152 = vmul.f32 %v150, 1.442695
    %v153 = vpow.pop %v152
    %v154 = vmul.f32 %v151, 1.442695
    %v155 = vpow.pop %v154
    %v156 = vadd.f32 %v153, 1.0
    %v157 = vadd.f32 %v155, 1.0
    %v158 = vrcp.pop %v156
    %v159 = vmul.f32 1.0, %v158
    %v160 = vrcp.pop %v157
    %v161 = vmul.f32 1.0, %v160
    %v162 = vpack.c.bf16 %v159, %v159
    %v163 = vpack.c.bf16 %v161, %v161
    %v164 = vld [vmem:[#allocation4] sm:$0xf]
    %v165 = vld [vmem:[#allocation4 + $0x4] sm:$0xf]
    %v166 = vld [vmem:[#allocation4 + $0x8] sm:$0xf]
    %v167 = vld [vmem:[#allocation4 + $0xc] sm:$0xf]
    %v168 = vld [vmem:[#allocation4 + $0x10] sm:$0xf]
    %v169 = vld [vmem:[#allocation4 + $0x14] sm:$0xf]
    %v170 = vld [vmem:[#allocation4 + $0x18] sm:$0xf]
    %v171 = vld [vmem:[#allocation4 + $0x1c] sm:$0xf]
    %v172 = vld [vmem:[#allocation4 + $0x20] sm:$0xf]
    %v173 = vld [vmem:[#allocation4 + $0x24] sm:$0xf]
    %v174 = vld [vmem:[#allocation4 + $0x28] sm:$0xf]
    %v175 = vld [vmem:[#allocation4 + $0x2c] sm:$0xf]
    %v176 = vld [vmem:[#allocation4 + $0x30] sm:$0xf]
    %v177 = vld [vmem:[#allocation4 + $0x34] sm:$0xf]
    %v178 = vld [vmem:[#allocation4 + $0x38] sm:$0xf]
    %v179 = vld [vmem:[#allocation4 + $0x3c] sm:$0xf]
    %v180 = vld [vmem:[#allocation4 + $0x40] sm:$0xf]
    %v181 = vld [vmem:[#allocation4 + $0x44] sm:$0xf]
    %v182 = vld [vmem:[#allocation4 + $0x48] sm:$0xf]
    %v183 = vld [vmem:[#allocation4 + $0x4c] sm:$0xf]
    %v184 = vld [vmem:[#allocation4 + $0x50] sm:$0xf]
    %v185 = vld [vmem:[#allocation4 + $0x54] sm:$0xf]
    %v186 = vld [vmem:[#allocation4 + $0x58] sm:$0xf]
    %v187 = vld [vmem:[#allocation4 + $0x5c] sm:$0xf]
    %v188 = vld [vmem:[#allocation4 + $0x60] sm:$0xf]
    %v189 = vld [vmem:[#allocation4 + $0x64] sm:$0xf]
    %v190 = vld [vmem:[#allocation4 + $0x68] sm:$0xf]
    %v191 = vld [vmem:[#allocation4 + $0x6c] sm:$0xf]
    %v192 = vld [vmem:[#allocation4 + $0x70] sm:$0xf]
    %v193 = vld [vmem:[#allocation4 + $0x74] sm:$0xf]
    %v194 = vld [vmem:[#allocation4 + $0x78] sm:$0xf]
    %v195 = vld [vmem:[#allocation4 + $0x7c] sm:$0xf]
    %v196 = vld [vmem:[%s4] sm:$0x1]
    %v198 = vlaneseq
    %v199 = vshrl.u32 %v198, 7
    %v200 = vsub.s32 0, %v199
    %v201 = vrot.slane %v196, %v200
    %v235 = vunpack.c.l.b16 %v164
    %v236 = vunpack.c.l.b16 %v165
    %v237 = vunpack.c.l.b16 %v166
    %v238 = vunpack.c.l.b16 %v167
    %v239 = vunpack.c.l.b16 %v168
    %v240 = vunpack.c.l.b16 %v169
    %v241 = vunpack.c.l.b16 %v170
    %v242 = vunpack.c.l.b16 %v171
    %v243 = vunpack.c.l.b16 %v172
    %v244 = vunpack.c.l.b16 %v173
    %v245 = vunpack.c.l.b16 %v174
    %v246 = vunpack.c.l.b16 %v175
    %v247 = vunpack.c.l.b16 %v176
    %v248 = vunpack.c.l.b16 %v177
    %v249 = vunpack.c.l.b16 %v178
    %v250 = vunpack.c.l.b16 %v179
    %v251 = vunpack.c.l.b16 %v180
    %v252 = vunpack.c.l.b16 %v181
    %v253 = vunpack.c.l.b16 %v182
    %v254 = vunpack.c.l.b16 %v183
    %v255 = vunpack.c.l.b16 %v184
    %v256 = vunpack.c.l.b16 %v185
    %v257 = vunpack.c.l.b16 %v186
    %v258 = vunpack.c.l.b16 %v187
    %v259 = vunpack.c.l.b16 %v188
    %v260 = vunpack.c.l.b16 %v189
    %v261 = vunpack.c.l.b16 %v190
    %v262 = vunpack.c.l.b16 %v191
    %v263 = vunpack.c.l.b16 %v192
    %v264 = vunpack.c.l.b16 %v193
    %v265 = vunpack.c.l.b16 %v194
    %v266 = vunpack.c.l.b16 %v195
    %v267 = vpack.c.b16 %v236, %v235
    %v268 = vpack.c.b16 %v238, %v237
    %v269 = vpack.c.b16 %v240, %v239
    %v270 = vpack.c.b16 %v242, %v241
    %v271 = vpack.c.b16 %v244, %v243
    %v272 = vpack.c.b16 %v246, %v245
    %v273 = vpack.c.b16 %v248, %v247
    %v274 = vpack.c.b16 %v250, %v249
    %v275 = vpack.c.b16 %v252, %v251
    %v276 = vpack.c.b16 %v254, %v253
    %v277 = vpack.c.b16 %v256, %v255
    %v278 = vpack.c.b16 %v258, %v257
    %v279 = vpack.c.b16 %v260, %v259
    %v280 = vpack.c.b16 %v262, %v261
    %v281 = vpack.c.b16 %v264, %v263
    %v282 = vpack.c.b16 %v266, %v265
    %299 = vmatprep.subr.bf16.mxu0 0
    %300 = vmatpush1.bf16.msra.mxu0 %v274
    %301 = vmatprep.subr.bf16.mxu0 0
    %302 = vmatpush1.bf16.msra.mxu0 %v273
    %303 = vmatprep.subr.bf16.mxu0 0
    %304 = vmatpush1.bf16.msra.mxu0 %v272
    %305 = vmatprep.subr.bf16.mxu0 0
    %306 = vmatpush1.bf16.msra.mxu0 %v271
    %307 = vmatprep.subr.bf16.mxu0 0
    %308 = vmatpush1.bf16.msra.mxu0 %v270
    %309 = vmatprep.subr.bf16.mxu0 0
    %310 = vmatpush1.bf16.msra.mxu0 %v269
    %311 = vmatprep.subr.bf16.mxu0 0
    %312 = vmatpush1.bf16.msra.mxu0 %v268
    %313 = vmatprep.subr.bf16.mxu0 0
    %314 = vmatpush1.bf16.msra.mxu0 %v267
    %315 = vmatprep.subr.bf16.mxu0 0
    %316 = vmatpush2.bf16.msra.mxu0 %v282
    %317 = vmatprep.subr.bf16.mxu0 0
    %318 = vmatpush2.bf16.msra.mxu0 %v281
    %319 = vmatprep.subr.bf16.mxu0 0
    %320 = vmatpush2.bf16.msra.mxu0 %v280
    %321 = vmatprep.subr.bf16.mxu0 0
    %322 = vmatpush2.bf16.msra.mxu0 %v279
    %323 = vmatprep.subr.bf16.mxu0 0
    %324 = vmatpush2.bf16.msra.mxu0 %v278
    %325 = vmatprep.subr.bf16.mxu0 0
    %326 = vmatpush2.bf16.msra.mxu0 %v277
    %327 = vmatprep.subr.bf16.mxu0 0
    %328 = vmatpush2.bf16.msra.mxu0 %v276
    %329 = vmatprep.subr.bf16.mxu0 0
    %330 = vmatpush2.bf16.msra.mxu0 %v275
    %331 = vmatprep.mubr.bf16.mxu0 %v163
    %332 = vmatmul.mubr.bf16.gmra.mxu0 %v162
    %v333 = vpop.f32.mrf.mxu0
    %v334 = vadd.f32 %v201, %v333
    %v335 = vpop.f32.mrf.mxu0
    %v336 = vpop.f32.mrf.mxu0
    %v337 = vpop.f32.mrf.mxu0
    %338 = vdwg.mxu0
    %v339 = vxor.u32 %v334, 2147483648
    %v340 = vmul.f32 %v339, 1.442695
    %v341 = vpow.pop %v340
    %v342 = vadd.f32 %v341, 1.0
    %v343 = vrcp.pop %v342
    %v344 = vmul.f32 1.0, %v343
    %v345 = vpack.c.bf16 %v344, %v344
    %v346 = vld [vmem:[#allocation6] sm:$0xf]
    %v347 = vld [vmem:[#allocation6 + $0x4] sm:$0xf]
    %v348 = vld [vmem:[#allocation6 + $0x8] sm:$0xf]
    %v349 = vld [vmem:[#allocation6 + $0xc] sm:$0xf]
    %v350 = vld [vmem:[#allocation6 + $0x10] sm:$0xf]
    %v351 = vld [vmem:[#allocation6 + $0x14] sm:$0xf]
    %v352 = vld [vmem:[#allocation6 + $0x18] sm:$0xf]
    %v353 = vld [vmem:[#allocation6 + $0x1c] sm:$0xf]
    %v354 = vld [vmem:[#allocation6 + $0x20] sm:$0xf]
    %v355 = vld [vmem:[#allocation6 + $0x24] sm:$0xf]
    %v356 = vld [vmem:[#allocation6 + $0x28] sm:$0xf]
    %v357 = vld [vmem:[#allocation6 + $0x2c] sm:$0xf]
    %v358 = vld [vmem:[#allocation6 + $0x30] sm:$0xf]
    %v359 = vld [vmem:[#allocation6 + $0x34] sm:$0xf]
    %v360 = vld [vmem:[#allocation6 + $0x38] sm:$0xf]
    %v361 = vld [vmem:[#allocation6 + $0x3c] sm:$0xf]
    %v362 = vld [vmem:[%s6] sm:$0x1]
    %v364 = vlaneseq
    %v365 = vshrl.u32 %v364, 7
    %v366 = vsub.s32 0, %v365
    %v367 = vrot.slane %v362, %v366
    %v385 = vunpack.c.l.b16 %v346
    %v386 = vunpack.c.l.b16 %v347
    %v387 = vunpack.c.l.b16 %v348
    %v388 = vunpack.c.l.b16 %v349
    %v389 = vunpack.c.l.b16 %v350
    %v390 = vunpack.c.l.b16 %v351
    %v391 = vunpack.c.l.b16 %v352
    %v392 = vunpack.c.l.b16 %v353
    %v393 = vunpack.c.l.b16 %v354
    %v394 = vunpack.c.l.b16 %v355
    %v395 = vunpack.c.l.b16 %v356
    %v396 = vunpack.c.l.b16 %v357
    %v397 = vunpack.c.l.b16 %v358
    %v398 = vunpack.c.l.b16 %v359
    %v399 = vunpack.c.l.b16 %v360
    %v400 = vunpack.c.l.b16 %v361
    %v401 = vpack.c.b16 %v386, %v385
    %v402 = vpack.c.b16 %v388, %v387
    %v403 = vpack.c.b16 %v390, %v389
    %v404 = vpack.c.b16 %v392, %v391
    %v405 = vpack.c.b16 %v394, %v393
    %v406 = vpack.c.b16 %v396, %v395
    %v407 = vpack.c.b16 %v398, %v397
    %v408 = vpack.c.b16 %v400, %v399
    %417 = vmatprep.subr.bf16.mxu0 0
    %418 = vmatpush1.bf16.msra.mxu0 %v408
    %419 = vmatprep.subr.bf16.mxu0 0
    %420 = vmatpush1.bf16.msra.mxu0 %v407
    %421 = vmatprep.subr.bf16.mxu0 0
    %422 = vmatpush1.bf16.msra.mxu0 %v406
    %423 = vmatprep.subr.bf16.mxu0 0
    %424 = vmatpush1.bf16.msra.mxu0 %v405
    %425 = vmatprep.subr.bf16.mxu0 0
    %426 = vmatpush1.bf16.msra.mxu0 %v404
    %427 = vmatprep.subr.bf16.mxu0 0
    %428 = vmatpush1.bf16.msra.mxu0 %v403
    %429 = vmatprep.subr.bf16.mxu0 0
    %430 = vmatpush1.bf16.msra.mxu0 %v402
    %431 = vmatprep.subr.bf16.mxu0 0
    %432 = vmatpush1.bf16.msra.mxu0 %v401
    %433 = vmatprep.subr.bf16.mxu0 0
    %434 = vmatpush2.bf16.msra.mxu0 0
    %435 = vmatprep.subr.bf16.mxu0 0
    %436 = vmatpush2.bf16.msra.mxu0 0
    %437 = vmatprep.subr.bf16.mxu0 0
    %438 = vmatpush2.bf16.msra.mxu0 0
    %439 = vmatprep.subr.bf16.mxu0 0
    %440 = vmatpush2.bf16.msra.mxu0 0
    %441 = vmatprep.subr.bf16.mxu0 0
    %442 = vmatpush2.bf16.msra.mxu0 0
    %443 = vmatprep.subr.bf16.mxu0 0
    %444 = vmatpush2.bf16.msra.mxu0 0
    %445 = vmatprep.subr.bf16.mxu0 0
    %446 = vmatpush2.bf16.msra.mxu0 0
    %447 = vmatprep.subr.bf16.mxu0 0
    %448 = vmatpush2.bf16.msra.mxu0 0
    %449 = vmatprep.mubr.bf16.mxu0 0
    %450 = vmatmul.mubr.bf16.gmra.mxu0 %v345
    %v451 = vpop.f32.mrf.mxu0
    %v452 = vadd.f32 %v367, %v451
    %v453 = vpop.f32.mrf.mxu0
    %v454 = vpop.f32.mrf.mxu0
    %v455 = vpop.f32.mrf.mxu0
    %456 = vdwg.mxu0
    %457 = vmax.xlane.f32.xlu0 %v452
    %v458 = vpop.xlane.xlu0 %457
    %v459 = vsub.f32 %v452, %v458
    %v460 = vmul.f32 %v459, 1.442695
    %v461 = vpow.pop %v460
    %462 = vadd.xlane.f32.xlu0 %v461
    %v463 = vpop.xlane.xlu0 %462
    %v464 = vrcp.pop %v463
    %v465 = vmul.f32 %v461, %v464
    %v466 = vpack.c.bf16 %v465, %v465
    %467 = vst [vmem:[%s7] sm:$0xf] %v466
    // Predicated region
    $region42: #{pasnet_forward.1} parent=1 // pred_check
      _
    $region43: #{pasnet_forward.1} parent=1 // pred_check_branch
      %469 = sbr.rel (0) target = $region45
    $region44: #{pasnet_forward.1} parent=1 // pred_region
      _
    $region45: #{pasnet_forward.1} parent=1 // pred_fallthru
      _
    // Predicated region
    $region46: #{pasnet_forward.1} parent=1 // pred_check
      _
    $region47: #{pasnet_forward.1} parent=1 // pred_check_branch
      %471 = sbr.rel (0) target = $region49
    $region48: #{pasnet_forward.1} parent=1 // pred_region
      _
    $region49: #{pasnet_forward.1} parent=1 // pred_fallthru
      _
    %472 = vsyncpa [#allocation3], 1
    %473 = vsyncpa [#allocation5], 1

</llo_original>
